<compile_context>
chip_gen: v6e
topology: v6e:2x2x1
jax: 0.10.0
libtpu: 0.0.40
codegen_flags: <defaults>
</compile_context>

<pallas_src>
import functools

import jax
import jax.numpy as jnp
from jax import lax
from jax.experimental import pallas as pl
from jax.experimental.pallas import tpu as pltpu

_NEG_BIG = -1e30  # finite "-inf" stand-in; exp(_NEG_BIG - m) underflows to 0.


def _attention_kernel(x_ref, w_ref, o_ref, m_sc, l_sc, acc_sc, *,
                      seq_len, block_t):
    """Processes one (TB, tT, H) tile of x.

    Grid = (num_batch_blocks, num_seq_blocks); the seq axis is the reduction
    axis (last, "arbitrary") with online-softmax state held in VMEM scratch.
    """
    t = pl.program_id(1)

    @pl.when(t == 0)
    def _init():
        m_sc[...] = jnp.full_like(m_sc, _NEG_BIG)
        l_sc[...] = jnp.zeros_like(l_sc)
        acc_sc[...] = jnp.zeros_like(acc_sc)

    x = x_ref[...].astype(jnp.float32)                      # (TB, tT, H)
    w = w_ref[...].astype(jnp.float32).reshape(1, 1, -1)    # (1, 1, H)

    # scores = <x, w>  -> (TB, tT); VPU multiply + lane reduce (no MXU).
    # (Linear bias omitted: constant shift along the softmax axis, cancels.)
    s = jnp.sum(x * w, axis=-1)

    if seq_len % block_t != 0:
        # Mask the padded tail of the last sequence tile.
        col = lax.broadcasted_iota(jnp.int32, s.shape, 1)
        s = jnp.where(t * block_t + col < seq_len, s, _NEG_BIG)
        col3 = lax.broadcasted_iota(jnp.int32, x.shape, 1)
        x = jnp.where(t * block_t + col3 < seq_len, x, 0.0)

    # Online softmax over the sequence axis.
    m_prev = m_sc[...]                                               # (TB, 1)
    m_new = jnp.maximum(m_prev, jnp.max(s, axis=-1, keepdims=True))  # (TB, 1)
    alpha = jnp.exp(m_prev - m_new)                                  # (TB, 1)
    p = jnp.exp(s - m_new)                                           # (TB, tT)

    l_sc[...] = alpha * l_sc[...] + jnp.sum(p, axis=-1, keepdims=True)
    # Weighted sum over this seq tile: batched (1, tT) x (tT, H) matmul (MXU).
    pv = jnp.einsum("bqk,bkh->bqh", p[:, None, :], x,
                    preferred_element_type=jnp.float32)[:, 0, :]     # (TB, H)
    acc_sc[...] = alpha * acc_sc[...] + pv
    m_sc[...] = m_new

    @pl.when(t == pl.num_programs(1) - 1)
    def _finalize():
        # Exact f32 divide: approx reciprocal is not accurate enough here.
        o_ref[...] = (acc_sc[...] / l_sc[...]).astype(o_ref.dtype)


def _choose_tiles(B, T, H, itemsize, budget_bytes):
    """Pick (block_b, block_t) so the double-buffered x tile + output block +
    f32 scratch fits the budget, respecting the (8,128)-or-full-dim rule."""

    def nbytes(tb, tt):
        x_tile = 2 * tb * tt * H * itemsize          # double-buffered input
        out_tile = 2 * tb * H * itemsize             # double-buffered output
        scratch = tb * H * 4 + 2 * tb * 4            # acc + m + l (f32)
        return x_tile + out_tile + scratch + 2 * H * itemsize

    tb = B if B <= 8 else 8
    if T <= 8:
        tt = T
    else:
        tt = 8
        while tt * 2 <= T and tt < 2048 and nbytes(tb, tt * 2) <= budget_bytes:
            tt *= 2
    if B > 8:
        while tb * 2 <= B and tb < 512 and nbytes(tb * 2, tt) <= budget_bytes:
            tb *= 2
    return tb, tt


def attention_forward(x, weight, bias=None, *, block_b=None, block_t=None,
                      vmem_limit_bytes=48 * 1024 * 1024):
    """x: (B, T, H); weight: (1, H) (nn.Linear(H, 1).weight layout).
    `bias` is accepted for interface parity but provably cancels through the
    softmax (constant shift along the softmax axis), so it is folded away.
    Returns (B, H)."""
    del bias  # softmax(s + b) == softmax(s): exact no-op for this module.
    B, T, H = x.shape
    weight = jnp.asarray(weight).reshape(1, H)

    itemsize = jnp.dtype(x.dtype).itemsize
    tb_auto, tt_auto = _choose_tiles(B, T, H, itemsize,
                                     budget_bytes=24 * 1024 * 1024)
    tb = block_b if block_b is not None else tb_auto
    tt = block_t if block_t is not None else tt_auto

    grid = (pl.cdiv(B, tb), pl.cdiv(T, tt))
    kernel = functools.partial(_attention_kernel, seq_len=T, block_t=tt)

    return pl.pallas_call(
        kernel,
        out_shape=jax.ShapeDtypeStruct((B, H), x.dtype),
        grid_spec=pltpu.PrefetchScalarGridSpec(
            num_scalar_prefetch=0,
            grid=grid,
            in_specs=[
                # (TB, tT, H) slab of x per step.
                pl.BlockSpec((tb, tt, H), lambda b, t: (b, t, 0)),
                # lane-dense (1, H) weight; constant block index => resident.
                pl.BlockSpec((1, H), lambda b, t: (0, 0)),
            ],
            # Lane-dense accumulator output block, same tile across the T axis.
            out_specs=pl.BlockSpec((tb, H), lambda b, t: (b, 0)),
            scratch_shapes=[
                pltpu.VMEM((tb, 1), jnp.float32),   # running max  m
                pltpu.VMEM((tb, 1), jnp.float32),   # running denom l
                pltpu.VMEM((tb, H), jnp.float32),   # weighted-sum accumulator
            ],
        ),
        compiler_params=pltpu.CompilerParams(
            dimension_semantics=("parallel", "arbitrary"),
            vmem_limit_bytes=vmem_limit_bytes,
        ),
    )(x, weight)


def attention_reference(x, weight, bias):
    """Pure-JAX reference matching the PyTorch forward semantics exactly."""
    scores = jnp.einsum("bth,oh->bto", x, weight) + jnp.reshape(bias, (1, 1, 1))
    w = jax.nn.softmax(scores, axis=1)        # softmax over seq axis
    return jnp.sum(x * w, axis=1)             # (B, H)


if __name__ == "__main__":
    key = jax.random.PRNGKey(0)
    kx, kw, kb, kx2 = jax.random.split(key, 4)

    # Primary small case implied by the module: batch=2, seq=8, hidden=32.
    B, T, H = 2, 8, 32
    x = jax.random.normal(kx, (B, T, H), dtype=jnp.float32)
    weight = jax.random.normal(kw, (1, H), dtype=jnp.float32) * 0.1  # Linear(H,1).weight
    bias = jax.random.normal(kb, (1, 1), dtype=jnp.float32) * 0.1

    out = jax.block_until_ready(attention_forward(x, weight, bias))
    ref = attention_reference(x, weight, bias)
    assert out.shape == (B, H)
    assert jnp.allclose(out, ref, atol=1e-3, rtol=1e-3), "mismatch vs reference (case 1)"

    # Second case: batch blocking + seq tiling with a ragged tail
    # (B > block_b, T % block_t != 0 -> online-softmax masking path).
    B2, T2, H2 = 16, 20, 32
    x2 = jax.random.normal(kx2, (B2, T2, H2), dtype=jnp.float32)
    w2 = jax.random.normal(kw, (1, H2), dtype=jnp.float32) * 0.1
    b2 = jax.random.normal(kb, (1, 1), dtype=jnp.float32) * 0.1

    out2 = jax.block_until_ready(
        attention_forward(x2, w2, b2, block_b=8, block_t=8))
    ref2 = attention_reference(x2, w2, b2)
    assert out2.shape == (B2, H2)
    assert jnp.allclose(out2, ref2, atol=1e-3, rtol=1e-3), "mismatch vs reference (case 2)"

    print("KERNEL_OK")
</pallas_src>

<mosaic_0001>
module attributes {stable_mosaic.version = 11 : i64} {
  func.func @_attention_kernel(%arg0: i32, %arg1: i32, %arg2: memref<2x8x32xf32, #tpu.memory_space<vmem>>, %arg3: memref<1x32xf32, #tpu.memory_space<vmem>>, %arg4: memref<2x32xf32, #tpu.memory_space<vmem>>, %arg5: memref<2x1xf32, #tpu.memory_space<vmem>>, %arg6: memref<2x1xf32, #tpu.memory_space<vmem>>, %arg7: memref<2x32xf32, #tpu.memory_space<vmem>>) attributes {dimension_semantics = [#tpu.dimension_semantics<parallel>, #tpu.dimension_semantics<arbitrary>], iteration_bounds = array<i64: 1, 1>, scalar_prefetch = 0 : i64, scratch_operands = 3 : i64, tpu.core_type = #tpu.core_type<tc>, window_params = [{transform_indices = @transform_0, window_bounds = array<i64: 2, 8, 32>}, {pipeline_mode = #tpu.pipeline_mode<synchronous>, transform_indices = @transform_1, window_bounds = array<i64: 1, 32>}, {transform_indices = @transform_2, window_bounds = array<i64: 2, 32>}]} {
    %c0_i32 = arith.constant 0 : i32
    %0 = arith.cmpi eq, %arg1, %c0_i32 : i32
    %1 = arith.extui %0 : i1 to i32
    %c0_i32_0 = arith.constant 0 : i32
    %2 = arith.cmpi ne, %1, %c0_i32_0 : i32
    scf.if %2 {
      %cst_22 = arith.constant -1.000000e+30 : f32
      %36 = vector.broadcast %cst_22 : f32 to vector<2x1xf32>
      %c0_23 = arith.constant 0 : index
      %c0_24 = arith.constant 0 : index
      %37 = vector.load %arg5[%c0_23, %c0_24] : memref<2x1xf32, #tpu.memory_space<vmem>>, vector<2x1xf32>
      tpu.vector_store %arg5[%c0_23, %c0_24], %36 {strides = array<i32>} : memref<2x1xf32, #tpu.memory_space<vmem>>, vector<2x1xf32>,
      %cst_25 = arith.constant 0.000000e+00 : f32
      %38 = vector.broadcast %cst_25 : f32 to vector<2x1xf32>
      %c0_26 = arith.constant 0 : index
      %c0_27 = arith.constant 0 : index
      %39 = vector.load %arg6[%c0_26, %c0_27] : memref<2x1xf32, #tpu.memory_space<vmem>>, vector<2x1xf32>
      tpu.vector_store %arg6[%c0_26, %c0_27], %38 {strides = array<i32>} : memref<2x1xf32, #tpu.memory_space<vmem>>, vector<2x1xf32>,
      %cst_28 = arith.constant 0.000000e+00 : f32
      %40 = vector.broadcast %cst_28 : f32 to vector<2x32xf32>
      %c0_29 = arith.constant 0 : index
      %c0_30 = arith.constant 0 : index
      %41 = vector.load %arg7[%c0_29, %c0_30] : memref<2x32xf32, #tpu.memory_space<vmem>>, vector<2x32xf32>
      tpu.vector_store %arg7[%c0_29, %c0_30], %40 {strides = array<i32>} : memref<2x32xf32, #tpu.memory_space<vmem>>, vector<2x32xf32>,
    } else {
    }
    %c0 = arith.constant 0 : index
    %c0_1 = arith.constant 0 : index
    %c0_2 = arith.constant 0 : index
    %3 = vector.load %arg2[%c0, %c0_1, %c0_2] : memref<2x8x32xf32, #tpu.memory_space<vmem>>, vector<2x8x32xf32>
    %c0_3 = arith.constant 0 : index
    %c0_4 = arith.constant 0 : index
    %4 = vector.load %arg3[%c0_3, %c0_4] : memref<1x32xf32, #tpu.memory_space<vmem>>, vector<1x32xf32>
    %5 = vector.shape_cast %4 : vector<1x32xf32> to vector<1x1x32xf32>
    %6 = vector.broadcast %5 : vector<1x1x32xf32> to vector<2x8x32xf32>
    %7 = arith.mulf %3, %6 : vector<2x8x32xf32>
    %cst = arith.constant dense<0.000000e+00> : vector<2x8xf32>
    %8 = vector.multi_reduction <add>, %7, %cst [2] : vector<2x8x32xf32> to vector<2x8xf32>
    %c0_5 = arith.constant 0 : index
    %c0_6 = arith.constant 0 : index
    %9 = vector.load %arg5[%c0_5, %c0_6] : memref<2x1xf32, #tpu.memory_space<vmem>>, vector<2x1xf32>
    %cst_7 = arith.constant dense<0xFF800000> : vector<2xf32>
    %10 = vector.multi_reduction <maximumf>, %8, %cst_7 [1] : vector<2x8xf32> to vector<2xf32>
    %11 = vector.shape_cast %10 : vector<2xf32> to vector<2x1xf32>
    %12 = arith.maximumf %9, %11 : vector<2x1xf32>
    %13 = arith.subf %9, %12 : vector<2x1xf32>
    %14 = math.exp %13 : vector<2x1xf32>
    %15 = vector.broadcast %12 : vector<2x1xf32> to vector<2x8xf32>
    %16 = arith.subf %8, %15 : vector<2x8xf32>
    %17 = math.exp %16 : vector<2x8xf32>
    %c0_8 = arith.constant 0 : index
    %c0_9 = arith.constant 0 : index
    %18 = vector.load %arg6[%c0_8, %c0_9] : memref<2x1xf32, #tpu.memory_space<vmem>>, vector<2x1xf32>
    %19 = arith.mulf %14, %18 : vector<2x1xf32>
    %cst_10 = arith.constant dense<0.000000e+00> : vector<2xf32>
    %20 = vector.multi_reduction <add>, %17, %cst_10 [1] : vector<2x8xf32> to vector<2xf32>
    %21 = vector.shape_cast %20 : vector<2xf32> to vector<2x1xf32>
    %22 = arith.addf %19, %21 : vector<2x1xf32>
    %c0_11 = arith.constant 0 : index
    %c0_12 = arith.constant 0 : index
    %23 = vector.load %arg6[%c0_11, %c0_12] : memref<2x1xf32, #tpu.memory_space<vmem>>, vector<2x1xf32>
    tpu.vector_store %arg6[%c0_11, %c0_12], %22 {strides = array<i32>} : memref<2x1xf32, #tpu.memory_space<vmem>>, vector<2x1xf32>,
    %24 = vector.shape_cast %17 : vector<2x8xf32> to vector<2x1x8xf32>
    "tpu.trace_start"() <{level = 10 : i32, message = "bqk,bkh->bqh"}> : () -> ()
    %cst_13 = arith.constant dense<0.000000e+00> : vector<2x1x32xf32>
    %25 = tpu.matmul %24, %3, %cst_13 {dimension_numbers = #tpu.dot_dimension_numbers<[2], [1], [1], [2], [0, 0, 0, 1, 1, 2], [0], [0]>} : vector<2x1x8xf32>, vector<2x8x32xf32>, vector<2x1x32xf32> -> vector<2x1x32xf32>
    "tpu.trace_stop"() : () -> ()
    %26 = vector.shape_cast %25 : vector<2x1x32xf32> to vector<2x32xf32>
    %c0_14 = arith.constant 0 : index
    %c0_15 = arith.constant 0 : index
    %27 = vector.load %arg7[%c0_14, %c0_15] : memref<2x32xf32, #tpu.memory_space<vmem>>, vector<2x32xf32>
    %28 = vector.broadcast %14 : vector<2x1xf32> to vector<2x32xf32>
    %29 = arith.mulf %28, %27 : vector<2x32xf32>
    %30 = arith.addf %29, %26 : vector<2x32xf32>
    %c0_16 = arith.constant 0 : index
    %c0_17 = arith.constant 0 : index
    %31 = vector.load %arg7[%c0_16, %c0_17] : memref<2x32xf32, #tpu.memory_space<vmem>>, vector<2x32xf32>
    tpu.vector_store %arg7[%c0_16, %c0_17], %30 {strides = array<i32>} : memref<2x32xf32, #tpu.memory_space<vmem>>, vector<2x32xf32>,
    %c0_18 = arith.constant 0 : index
    %c0_19 = arith.constant 0 : index
    %32 = vector.load %arg5[%c0_18, %c0_19] : memref<2x1xf32, #tpu.memory_space<vmem>>, vector<2x1xf32>
    tpu.vector_store %arg5[%c0_18, %c0_19], %12 {strides = array<i32>} : memref<2x1xf32, #tpu.memory_space<vmem>>, vector<2x1xf32>,
    %c0_i32_20 = arith.constant 0 : i32
    %33 = arith.cmpi eq, %arg1, %c0_i32_20 : i32
    %34 = arith.extui %33 : i1 to i32
    %c0_i32_21 = arith.constant 0 : i32
    %35 = arith.cmpi ne, %34, %c0_i32_21 : i32
    scf.if %35 {
      %c0_22 = arith.constant 0 : index
      %c0_23 = arith.constant 0 : index
      %36 = vector.load %arg7[%c0_22, %c0_23] : memref<2x32xf32, #tpu.memory_space<vmem>>, vector<2x32xf32>
      %c0_24 = arith.constant 0 : index
      %c0_25 = arith.constant 0 : index
      %37 = vector.load %arg6[%c0_24, %c0_25] : memref<2x1xf32, #tpu.memory_space<vmem>>, vector<2x1xf32>
      %38 = vector.broadcast %37 : vector<2x1xf32> to vector<2x32xf32>
      %39 = arith.divf %36, %38 : vector<2x32xf32>
      %c0_26 = arith.constant 0 : index
      %c0_27 = arith.constant 0 : index
      %40 = vector.load %arg4[%c0_26, %c0_27] : memref<2x32xf32, #tpu.memory_space<vmem>>, vector<2x32xf32>
      tpu.vector_store %arg4[%c0_26, %c0_27], %39 {strides = array<i32>} : memref<2x32xf32, #tpu.memory_space<vmem>>, vector<2x32xf32>,
    } else {
    }
    return
  }
  func.func @transform_0(%arg0: i32, %arg1: i32) -> (i32, i32, i32) {
    %c0_i32 = arith.constant 0 : i32
    %c0_i32_0 = arith.constant 0 : i32
    return %arg0, %arg1, %c0_i32 : i32, i32, i32
  }
  func.func @transform_1(%arg0: i32, %arg1: i32) -> (i32, i32) {
    %c0_i32 = arith.constant 0 : i32
    %c0_i32_0 = arith.constant 0 : i32
    %c0_i32_1 = arith.constant 0 : i32
    return %c0_i32, %c0_i32_0 : i32, i32
  }
  func.func @transform_2(%arg0: i32, %arg1: i32) -> (i32, i32) {
    %c0_i32 = arith.constant 0 : i32
    %c0_i32_0 = arith.constant 0 : i32
    return %arg0, %c0_i32 : i32, i32
  }
}

</mosaic_0001>

<llo_original>
// kernel: tpu_custom_call.1
$region0: #{tpu_custom_call.1}
  #allocation0 [shape = 'u32[]', space=smem, size = 0x4, offset = 0x4, fixed_abs, tag = 'smem constant byte address 0x4 - core index']
  #allocation1 [shape = 'u32[144,128]{1,0:T(1,128)}', space=vmem, size = 0x12000, scoped, tag = 'internal scratch']
  #allocation2 [shape = 'f32[2,1]{1,0:T(2,128)}', space=vmem, size = 0x400, scoped, tag = 'scratch operand']
  #allocation3 [shape = 'f32[2,1]{1,0:T(2,128)}', space=vmem, size = 0x400, scoped, tag = 'scratch operand']
  #allocation4 [shape = 'f32[2,32]{1,0:T(2,128)}', space=vmem, size = 0x400, scoped, tag = 'scratch operand']
  %s0 = inlined_call_operand.hbm [shape: f32[2,8,32], index: 0, kind: input, shape index: {}]
  %s1 = inlined_call_operand.vmem [shape: f32[1,32], index: 1, kind: input, shape index: {}]
  %s2 = inlined_call_operand.hbm [shape: f32[2,32], index: 2, kind: output, shape index: {}]
  %s3 = sld [smem:[#allocation0]]
  $region30: #{tpu_custom_call.1} parent=0
    _
  %s5 = ssub.s32 1, %s3
  %s6 = scalar_select 0, %s5, %s3
  $region1: #{tpu_custom_call.1} parent=0
    #allocation5 [shape = 'u8[8192]{0}', space=vmem, size = 0x2000, scoped, tag = 'input window, operand 0, single buffered']
    #allocation6 [shape = 's32[1]{0}', space=sflag, size = 0x4, scoped, tag = 'scoped memory for tpu_custom_call.1']
    #allocation7 [shape = 's32[1]{0}', space=sflag, size = 0x4, scoped, tag = 'scoped memory for tpu_custom_call.1']
    #allocation8 [shape = 'u8[1024]{0}', space=vmem, size = 0x400, scoped, tag = 'output window, operand 0, single buffered']
    %7 = vsyncpa [#allocation6], 0
    %8 = vsyncpa [#allocation7], 0
    // Predicated region
    $region2: #{tpu_custom_call.1} parent=1 // pred_check
      _
    $region3: #{tpu_custom_call.1} parent=1 // pred_check_branch
      %10 = sbr.rel (0) target = $region5
    $region4: #{tpu_custom_call.1} parent=1 // pred_region
      %s12 = ssub.s32 256, 256
      %13 = vsyncadd [#allocation6], %s12
      %s14 = sshll.u32 [#allocation5], 4
      %s15 = int_to_ptr.vmem [resolvable:$true] %s14
      %20 = dma.hbm_to_vmem [thread:$0]  %s0, 256, %s15, [#allocation6], 128, 128, 8
    $region5: #{tpu_custom_call.1} parent=1 // pred_fallthru
      _
    // Predicated region
    $region6: #{tpu_custom_call.1} parent=1 // pred_check
      _
    $region7: #{tpu_custom_call.1} parent=1 // pred_check_branch
      %22 = sbr.rel (0) target = $region9
    $region8: #{tpu_custom_call.1} parent=1 // pred_region
      _
    $region9: #{tpu_custom_call.1} parent=1 // pred_fallthru
      _
    // Predicated region
    $region10: #{tpu_custom_call.1} parent=1 // pred_check
      _
    $region11: #{tpu_custom_call.1} parent=1 // pred_check_branch
      %24 = sbr.rel (0) target = $region13
    $region12: #{tpu_custom_call.1} parent=1 // pred_region
      %25 = dma.done [#allocation6], 256
    $region13: #{tpu_custom_call.1} parent=1 // pred_fallthru
      _
    %p26 = scmp.eq.s32.totalorder 0, 0
    // Predicated region
    $region14: #{tpu_custom_call.1} parent=1 // pred_check
      %p27 = pneg %p26
    $region15: #{tpu_custom_call.1} parent=1 // pred_check_branch
      %29 = sbr.rel (%p27) target = $region17
    $region16: #{tpu_custom_call.1} parent=1 // pred_region
      %vm30 = vcmask 1024
      %31 = vst.msk [vmem:[#allocation2] sm:$0x3] %vm30, -1e+30
      %32 = vst.msk [vmem:[#allocation3] sm:$0x3] %vm30, 0.0
      %vm33 = vcmask 254976
      %34 = vst.msk [vmem:[#allocation4] sm:$0x3] %vm33, 0.0
    $region17: #{tpu_custom_call.1} parent=1 // pred_fallthru
      _
    %v35 = vld [vmem:[#allocation5] sm:$0xff]
    %v36 = vld [vmem:[#allocation5 + $0x8] sm:$0xff]
    %v37 = vld [vmem:[%s1] sm:$0x1]
    %v39 = vlaneseq
    %v40 = vshrl.u32 %v39, 7
    %v41 = vsub.s32 0, %v40
    %v42 = vrot.slane %v37, %v41
    %v44 = vmul.f32 %v35, %v42
    %v45 = vmul.f32 %v36, %v42
    %vm46 = vcmask 261120
    %v47 = vsel %vm46, %v44, 0.0
    %48 = vadd.xlane.f32.xlu0 %v47
    %v49 = vpop.xlane.xlu0 %48
    %v50 = vsel %vm46, %v45, 0.0
    %51 = vadd.xlane.f32.xlu0 %v50
    %v52 = vpop.xlane.xlu0 %51
    %v53 = vld [vmem:[#allocation2] sm:$0x3]
    %v56 = vlaneseq
    %v57 = vand.u32 %v56, 127
    %v58 = vlaneseq
    %v59 = vshrl.u32 %v58, 7
    %v60 = vsub.s32 %v57, %v59
    %v61 = vrot.slane %v49, %v60
    %v62 = vlaneseq
    %v63 = vshrl.u32 %v62, 7
    %v64 = vsub.s32 %v57, %v63
    %v65 = vrot.slane %v52, %v64
    %vm66 = vcmask 1041409
    %v67 = vsel %vm66, %v65, %v61
    %vm69 = vcmask 58368
    %v70 = vsel %vm69, %v67, -inf
    %71 = vmax.xlane.f32.xlu0 %v70
    %v72 = vpop.xlane.xlu0 %71
    %v73 = vmax.f32 %v53, %v72
    %v74 = vsub.f32 %v53, %v73
    %v75 = vmul.f32 %v74, 1.442695
    %v76 = vpow.pop %v75
    %78 = vset.pattern.permute.xlu0 0
    %79 = vperm.xlu0 %78, %v73
    %v80 = vpop.permute.xlu0 %79
    %v81 = vlaneseq
    %v82 = vshrl.u32 %v81, 7
    %v83 = vsub.s32 0, %v82
    %v84 = vrot.slane %v80, %v83
    %v85 = vlaneseq
    %v86 = vshrl.u32 %v85, 7
    %v87 = vsub.s32 1, %v86
    %v88 = vrot.slane %v80, %v87
    %v91 = vsub.f32 %v49, %v84
    %v92 = vsub.f32 %v52, %v88
    %v93 = vmul.f32 %v91, 1.442695
    %v94 = vpow.pop %v93
    %v95 = vmul.f32 %v92, 1.442695
    %v96 = vpow.pop %v95
    %v97 = vld [vmem:[#allocation3] sm:$0x3]
    %v98 = vmul.f32 %v76, %v97
    %101 = vset.pattern.permute.xlu0 0
    %102 = vperm.xlu0 %101, %v94
    %v103 = vpop.permute.xlu0 %102
    %104 = vset.pattern.permute.xlu0 0
    %105 = vperm.xlu0 %104, %v96
    %v106 = vpop.permute.xlu0 %105
    %v107 = vlaneseq
    %v108 = vshrl.u32 %v107, 7
    %v109 = vsub.s32 %v57, %v108
    %v110 = vrot.slane %v103, %v109
    %v111 = vlaneseq
    %v112 = vshrl.u32 %v111, 7
    %v113 = vsub.s32 %v57, %v112
    %v114 = vrot.slane %v106, %v113
    %v115 = vsel %vm66, %v114, %v110
    %v117 = vsel %vm69, %v115, 0.0
    %118 = vadd.xlane.f32.xlu0 %v117
    %v119 = vpop.xlane.xlu0 %118
    %v120 = vadd.f32 %v98, %v119
    %vm121 = vcmask 1024
    %122 = vst.msk [vmem:[#allocation3] sm:$0x3] %vm121, %v120
    %vm123 = vcmask 64512
    %v124 = vsel %vm123, %v110, 0
    %126 = vmatprep.subr.mxu0 0.0
    %127 = vmatpush1.msra.mxu0 0.0
    %128 = vmatprep.subr.mxu0 0.0
    %129 = vmatpush1.msra.mxu0 0.0
    %130 = vmatprep.subr.mxu0 0.0
    %131 = vmatpush1.msra.mxu0 0.0
    %132 = vmatprep.subr.mxu0 0.0
    %133 = vmatpush1.msra.mxu0 0.0
    %134 = vmatprep.subr.mxu0 0.0
    %135 = vmatpush1.msra.mxu0 0.0
    %136 = vmatprep.subr.mxu0 0.0
    %137 = vmatpush1.msra.mxu0 0.0
    %138 = vmatprep.subr.mxu0 0.0
    %139 = vmatpush1.msra.mxu0 0.0
    %140 = vmatprep.subr.mxu0 0.0
    %141 = vmatpush1.msra.mxu0 0.0
    %142 = vmatprep.subr.mxu0 0.0
    %143 = vmatpush1.msra.mxu0 0.0
    %144 = vmatprep.subr.mxu0 0.0
    %145 = vmatpush1.msra.mxu0 0.0
    %146 = vmatprep.subr.mxu0 0.0
    %147 = vmatpush1.msra.mxu0 0.0
    %148 = vmatprep.subr.mxu0 0.0
    %149 = vmatpush1.msra.mxu0 0.0
    %150 = vmatprep.subr.mxu0 0.0
    %151 = vmatpush1.msra.mxu0 0.0
    %152 = vmatprep.subr.mxu0 0.0
    %153 = vmatpush1.msra.mxu0 0.0
    %154 = vmatprep.subr.mxu0 0.0
    %155 = vmatpush1.msra.mxu0 0.0
    %156 = vmatprep.subr.mxu0 0.0
    %157 = vmatpush1.msra.mxu0 %v35
    %158 = vmatprep.subr.mxu0 0.0
    %159 = vmatpush2.msra.mxu0 0.0
    %160 = vmatprep.subr.mxu0 0.0
    %161 = vmatpush2.msra.mxu0 0.0
    %162 = vmatprep.subr.mxu0 0.0
    %163 = vmatpush2.msra.mxu0 0.0
    %164 = vmatprep.subr.mxu0 0.0
    %165 = vmatpush2.msra.mxu0 0.0
    %166 = vmatprep.subr.mxu0 0.0
    %167 = vmatpush2.msra.mxu0 0.0
    %168 = vmatprep.subr.mxu0 0.0
    %169 = vmatpush2.msra.mxu0 0.0
    %170 = vmatprep.subr.mxu0 0.0
    %171 = vmatpush2.msra.mxu0 0.0
    %172 = vmatprep.subr.mxu0 0.0
    %173 = vmatpush2.msra.mxu0 0.0
    %174 = vmatprep.subr.mxu0 0.0
    %175 = vmatpush2.msra.mxu0 0.0
    %176 = vmatprep.subr.mxu0 0.0
    %177 = vmatpush2.msra.mxu0 0.0
    %178 = vmatprep.subr.mxu0 0.0
    %179 = vmatpush2.msra.mxu0 0.0
    %180 = vmatprep.subr.mxu0 0.0
    %181 = vmatpush2.msra.mxu0 0.0
    %182 = vmatprep.subr.mxu0 0.0
    %183 = vmatpush2.msra.mxu0 0.0
    %184 = vmatprep.subr.mxu0 0.0
    %185 = vmatpush2.msra.mxu0 0.0
    %186 = vmatprep.subr.mxu0 0.0
    %187 = vmatpush2.msra.mxu0 0.0
    %188 = vmatprep.subr.mxu0 0.0
    %189 = vmatpush2.msra.mxu0 0.0
    %190 = vmatprep.mubr.f32.mxu0 0.0
    %191 = vmatmul.mubr.f32.gmra.mxu0 %v124
    %v192 = vpop.f32.mrf.mxu0
    %v193 = vadd.f32 0.0, %v192
    %v194 = vpop.f32.mrf.mxu0
    %195 = vdwg.mxu0
    %v196 = vsel %vm123, %v114, 0
    %198 = vmatprep.subr.mxu0 0.0
    %199 = vmatpush1.msra.mxu0 0.0
    %200 = vmatprep.subr.mxu0 0.0
    %201 = vmatpush1.msra.mxu0 0.0
    %202 = vmatprep.subr.mxu0 0.0
    %203 = vmatpush1.msra.mxu0 0.0
    %204 = vmatprep.subr.mxu0 0.0
    %205 = vmatpush1.msra.mxu0 0.0
    %206 = vmatprep.subr.mxu0 0.0
    %207 = vmatpush1.msra.mxu0 0.0
    %208 = vmatprep.subr.mxu0 0.0
    %209 = vmatpush1.msra.mxu0 0.0
    %210 = vmatprep.subr.mxu0 0.0
    %211 = vmatpush1.msra.mxu0 0.0
    %212 = vmatprep.subr.mxu0 0.0
    %213 = vmatpush1.msra.mxu0 0.0
    %214 = vmatprep.subr.mxu0 0.0
    %215 = vmatpush1.msra.mxu0 0.0
    %216 = vmatprep.subr.mxu0 0.0
    %217 = vmatpush1.msra.mxu0 0.0
    %218 = vmatprep.subr.mxu0 0.0
    %219 = vmatpush1.msra.mxu0 0.0
    %220 = vmatprep.subr.mxu0 0.0
    %221 = vmatpush1.msra.mxu0 0.0
    %222 = vmatprep.subr.mxu0 0.0
    %223 = vmatpush1.msra.mxu0 0.0
    %224 = vmatprep.subr.mxu0 0.0
    %225 = vmatpush1.msra.mxu0 0.0
    %226 = vmatprep.subr.mxu0 0.0
    %227 = vmatpush1.msra.mxu0 0.0
    %228 = vmatprep.subr.mxu0 0.0
    %229 = vmatpush1.msra.mxu0 %v36
    %230 = vmatprep.subr.mxu0 0.0
    %231 = vmatpush2.msra.mxu0 0.0
    %232 = vmatprep.subr.mxu0 0.0
    %233 = vmatpush2.msra.mxu0 0.0
    %234 = vmatprep.subr.mxu0 0.0
    %235 = vmatpush2.msra.mxu0 0.0
    %236 = vmatprep.subr.mxu0 0.0
    %237 = vmatpush2.msra.mxu0 0.0
    %238 = vmatprep.subr.mxu0 0.0
    %239 = vmatpush2.msra.mxu0 0.0
    %240 = vmatprep.subr.mxu0 0.0
    %241 = vmatpush2.msra.mxu0 0.0
    %242 = vmatprep.subr.mxu0 0.0
    %243 = vmatpush2.msra.mxu0 0.0
    %244 = vmatprep.subr.mxu0 0.0
    %245 = vmatpush2.msra.mxu0 0.0
    %246 = vmatprep.subr.mxu0 0.0
    %247 = vmatpush2.msra.mxu0 0.0
    %248 = vmatprep.subr.mxu0 0.0
    %249 = vmatpush2.msra.mxu0 0.0
    %250 = vmatprep.subr.mxu0 0.0
    %251 = vmatpush2.msra.mxu0 0.0
    %252 = vmatprep.subr.mxu0 0.0
    %253 = vmatpush2.msra.mxu0 0.0
    %254 = vmatprep.subr.mxu0 0.0
    %255 = vmatpush2.msra.mxu0 0.0
    %256 = vmatprep.subr.mxu0 0.0
    %257 = vmatpush2.msra.mxu0 0.0
    %258 = vmatprep.subr.mxu0 0.0
    %259 = vmatpush2.msra.mxu0 0.0
    %260 = vmatprep.subr.mxu0 0.0
    %261 = vmatpush2.msra.mxu0 0.0
    %262 = vmatprep.mubr.f32.mxu0 0.0
    %263 = vmatmul.mubr.f32.gmra.mxu0 %v196
    %v264 = vpop.f32.mrf.mxu0
    %v265 = vadd.f32 0.0, %v264
    %v266 = vpop.f32.mrf.mxu0
    %267 = vdwg.mxu0
    %v268 = vld [vmem:[#allocation4] sm:$0x3]
    %270 = vset.pattern.permute.xlu0 0
    %271 = vperm.xlu0 %270, %v76
    %v272 = vpop.permute.xlu0 %271
    %v274 = vmul.f32 %v272, %v268
    %v277 = vrot.slane %v265, 7
    %v278 = vsel %vm66, %v277, %v193
    %v280 = vadd.f32 %v274, %v278
    %vm281 = vcmask 254976
    %282 = vst.msk [vmem:[#allocation4] sm:$0x3] %vm281, %v280
    %283 = vst.msk [vmem:[#allocation2] sm:$0x3] %vm121, %v73
    // Predicated region
    $region18: #{tpu_custom_call.1} parent=1 // pred_check
      %p284 = pneg %p26
    $region19: #{tpu_custom_call.1} parent=1 // pred_check_branch
      %286 = sbr.rel (%p284) target = $region21
    $region20: #{tpu_custom_call.1} parent=1 // pred_region
      %v287 = vld [vmem:[#allocation4] sm:$0x3]
      %v288 = vld [vmem:[#allocation3] sm:$0x3]
      %290 = vset.pattern.permute.xlu0 0
      %291 = vperm.xlu0 %290, %v288
      %v292 = vpop.permute.xlu0 %291
      %v294 = vrcp.pop %v292
      %v295 = vmul.f32 %v287, %v294
      %296 = vst.msk [vmem:[#allocation8] sm:$0x3] %vm281, %v295
    $region21: #{tpu_custom_call.1} parent=1 // pred_fallthru
      _
    // Predicated region
    $region22: #{tpu_custom_call.1} parent=1 // pred_check
      _
    $region23: #{tpu_custom_call.1} parent=1 // pred_check_branch
      %298 = sbr.rel (0) target = $region25
    $region24: #{tpu_custom_call.1} parent=1 // pred_region
      %s300 = ssub.s32 32, 32
      %301 = vsyncadd [#allocation7], %s300
      %s303 = sshll.u32 [#allocation8], 4
      %s304 = int_to_ptr.vmem [resolvable:$true] %s303
      %306 = dma.vmem_to_hbm [thread:$0]  %s304, 32, %s2, [#allocation7]
    $region25: #{tpu_custom_call.1} parent=1 // pred_fallthru
      _
    // Predicated region
    $region26: #{tpu_custom_call.1} parent=1 // pred_check
      _
    $region27: #{tpu_custom_call.1} parent=1 // pred_check_branch
      %308 = sbr.rel (0) target = $region29
    $region28: #{tpu_custom_call.1} parent=1 // pred_region
      %309 = dma.done [#allocation7], 32
    $region29: #{tpu_custom_call.1} parent=1 // pred_fallthru
      _
    %310 = vsyncpa [#allocation6], 1
    %311 = vsyncpa [#allocation7], 1

</llo_original>
